<compile_context>
chip_gen: v7x
topology: tpu7x:2x2x1
jax: 0.10.0
libtpu: 0.0.40
codegen_flags: <defaults>
</compile_context>

<pallas_src>
import functools

import jax
import jax.numpy as jnp
from jax.experimental import pallas as pl
from jax.experimental.pallas import tpu as pltpu

_LANE = 128
_SUBLANE = 8
_SMALL_BATCH = 256   # gridless single-shot path below this batch size


def _round_up(n, m):
    return (n + m - 1) // m * m


def mlp_kernel(x_ref, w1_ref, b1_ref, w2_ref, b2_ref, o_ref):
    # Cast x to the weight dtype inside the kernel (bf16 MXU path when the
    # params were prepared in bf16; no-op for f32 params).
    x = x_ref[...].astype(w1_ref.dtype)
    # hidden = relu(x @ W1 + b1); bias add + ReLU in f32 on the VPU.
    h = jnp.dot(x, w1_ref[...], preferred_element_type=jnp.float32)
    h = jnp.maximum(h + b1_ref[...], 0.0)            # b1 is [1, Hp], broadcasts
    # out = h @ W2 + b2
    y = jnp.dot(h.astype(w2_ref.dtype), w2_ref[...],
                preferred_element_type=jnp.float32)
    o_ref[...] = (y + b2_ref[...]).astype(o_ref.dtype)


def init_net_params(w1, b1, w2, b2, *, use_bf16=True):
    """Pad / cast Linear parameters ONCE (hoisted out of the forward path).

    w1: [F, H], b1: [H], w2: [H, O], b2: [O]  (weights are [in, out]).
    The hidden dim is zero-padded to a multiple of 128 lanes: padded hidden
    columns see zero weight and zero bias -> relu(0) = 0 -> contribute nothing
    to the second GEMM.  The output dim O is left unpadded.
    """
    F, H = w1.shape
    O = w2.shape[1]
    Hp = _round_up(H, _LANE)
    wd = jnp.bfloat16 if use_bf16 else jnp.float32

    w1_p = jnp.zeros((F, Hp), wd).at[:, :H].set(w1.astype(wd))
    b1_p = jnp.zeros((1, Hp), jnp.float32).at[:, :H].set(b1.astype(jnp.float32))
    w2_p = jnp.zeros((Hp, O), wd).at[:H, :].set(w2.astype(wd))
    b2_p = b2.astype(jnp.float32).reshape(1, O)
    return (w1_p, b1_p, w2_p, b2_p)


def net_forward(x, params, *, block_b=512):
    """Pallas forward pass.  x: [B, F] float32; params from init_net_params."""
    w1_p, b1_p, w2_p, b2_p = params
    B, F = x.shape
    Fw, Hp = w1_p.shape
    O = w2_p.shape[1]
    assert Fw == F, "x feature dim does not match prepared weights"

    w_itemsize = w1_p.dtype.itemsize
    param_bytes = (w1_p.size + w2_p.size) * w_itemsize + (b1_p.size + b2_p.size) * 4
    cost = pl.CostEstimate(
        flops=2 * B * (F * Hp + Hp * O),
        transcendentals=0,
        bytes_accessed=B * F * x.dtype.itemsize + param_bytes + B * O * 4,
    )

    if B <= _SMALL_BATCH:
        # Small batch: single gridless call, all operands resident in VMEM.
        # x is passed straight through (no pad / copy on the latency path).
        return pl.pallas_call(
            mlp_kernel,
            out_shape=jax.ShapeDtypeStruct((B, O), jnp.float32),
            in_specs=[pl.BlockSpec(memory_space=pltpu.MemorySpace.VMEM)] * 5,
            out_specs=pl.BlockSpec(memory_space=pltpu.MemorySpace.VMEM),
            cost_estimate=cost,
        )(x, w1_p, b1_p, w2_p, b2_p)

    # Large batch: tile over batch with at least 2 grid steps so
    # dimension_semantics=("parallel",) can split work across the two v7x
    # TensorCores.  No wrapper-side batch padding: Pallas masks the edge block
    # (rows are independent; OOB output writes are masked).
    TB = min(block_b, _round_up(pl.cdiv(B, 2), _SUBLANE))
    grid = (pl.cdiv(B, TB),)

    # VMEM budget: params (double-buffered by default) + double-buffered x/out
    # blocks + f32 hidden intermediate, with headroom.  Clamped well under the
    # v7x 64 MiB physical ceiling (v5e/v6e have 128 MiB).
    resident = 2 * ((F * Hp + Hp * O) * w_itemsize + (Hp + O) * 4)
    io = 2 * TB * (F * x.dtype.itemsize + O * 4)
    hidden = 2 * TB * Hp * 4
    vmem_limit = min(max(int(1.5 * (resident + io + hidden)) + (4 << 20),
                         16 << 20), 48 << 20)

    return pl.pallas_call(
        mlp_kernel,
        out_shape=jax.ShapeDtypeStruct((B, O), jnp.float32),
        grid=grid,
        in_specs=[
            pl.BlockSpec((TB, F), lambda i: (i, 0)),   # x: streamed per step
            pl.BlockSpec((F, Hp), lambda i: (0, 0)),   # weights/biases stay
            pl.BlockSpec((1, Hp), lambda i: (0, 0)),   # VMEM-resident (same
            pl.BlockSpec((Hp, O), lambda i: (0, 0)),   # block index every step
            pl.BlockSpec((1, O), lambda i: (0, 0)),    # -> no re-DMA)
        ],
        out_specs=pl.BlockSpec((TB, O), lambda i: (i, 0)),
        compiler_params=pltpu.CompilerParams(
            dimension_semantics=("parallel",),
            vmem_limit_bytes=vmem_limit),
        cost_estimate=cost,
    )(x, w1_p, b1_p, w2_p, b2_p)


if __name__ == "__main__":
    # Net(n_feature=32, n_hidden=32, n_output=8), batch=8
    B, F, H, O = 8, 32, 32, 8

    key = jax.random.PRNGKey(0)
    kx, k1, k2, k3, k4, kx2 = jax.random.split(key, 6)

    x = jax.random.normal(kx, (B, F), dtype=jnp.float32)

    # Deterministic init mimicking torch.nn.Linear: U(-1/sqrt(fan_in), ...)
    lim1 = 1.0 / jnp.sqrt(jnp.float32(F))
    lim2 = 1.0 / jnp.sqrt(jnp.float32(H))
    w1 = jax.random.uniform(k1, (F, H), jnp.float32, -lim1, lim1)
    b1 = jax.random.uniform(k2, (H,), jnp.float32, -lim1, lim1)
    w2 = jax.random.uniform(k3, (H, O), jnp.float32, -lim2, lim2)
    b2 = jax.random.uniform(k4, (O,), jnp.float32, -lim2, lim2)

    def reference(xin):
        return jnp.maximum(xin @ w1 + b1, 0.0) @ w2 + b2

    fwd = jax.jit(functools.partial(net_forward, block_b=512))

    # 1) Default bf16-MXU params, small-batch gridless path.
    params_bf16 = init_net_params(w1, b1, w2, b2, use_bf16=True)
    out_bf16 = fwd(x, params_bf16)
    jax.block_until_ready(out_bf16)
    assert out_bf16.shape == (B, O)
    assert jnp.allclose(out_bf16, reference(x), atol=5e-2, rtol=5e-2), \
        "bf16 path mismatch vs reference"

    # 2) f32 params, tight-tolerance check on the same small-batch path.
    params_f32 = init_net_params(w1, b1, w2, b2, use_bf16=False)
    out_f32 = fwd(x, params_f32)
    jax.block_until_ready(out_f32)
    assert jnp.allclose(out_f32, reference(x), atol=1e-5), \
        "f32 path mismatch vs reference"

    # 3) Gridded large-batch path (2 "parallel" steps, masked edge block).
    B2 = 600
    x2 = jax.random.normal(kx2, (B2, F), dtype=jnp.float32)
    out2 = fwd(x2, params_f32)
    jax.block_until_ready(out2)
    assert out2.shape == (B2, O)
    assert jnp.allclose(out2, reference(x2), atol=1e-5), \
        "gridded path mismatch vs reference"

    print("KERNEL_OK")
</pallas_src>

<mosaic_0001>
module attributes {stable_mosaic.version = 11 : i64} {
  func.func @mlp_kernel(%arg0: memref<8x32xf32, #tpu.memory_space<vmem>>, %arg1: memref<32x128xbf16, #tpu.memory_space<vmem>>, %arg2: memref<1x128xf32, #tpu.memory_space<vmem>>, %arg3: memref<128x8xbf16, #tpu.memory_space<vmem>>, %arg4: memref<1x8xf32, #tpu.memory_space<vmem>>, %arg5: memref<8x8xf32, #tpu.memory_space<vmem>>) attributes {dimension_semantics = [], scalar_prefetch = 0 : i64, scratch_operands = 0 : i64, tpu.core_type = #tpu.core_type<tc>} {
    %c0 = arith.constant 0 : index
    %c0_0 = arith.constant 0 : index
    %0 = vector.load %arg0[%c0, %c0_0] : memref<8x32xf32, #tpu.memory_space<vmem>>, vector<8x32xf32>
    %1 = arith.truncf %0 : vector<8x32xf32> to vector<8x32xbf16>
    %c0_1 = arith.constant 0 : index
    %c0_2 = arith.constant 0 : index
    %2 = vector.load %arg1[%c0_1, %c0_2] : memref<32x128xbf16, #tpu.memory_space<vmem>>, vector<32x128xbf16>
    %cst = arith.constant dense<0.000000e+00> : vector<8x128xf32>
    %3 = tpu.matmul %1, %2, %cst {dimension_numbers = #tpu.dot_dimension_numbers<[1], [0], [0], [1], [0, 0, 1, 1], [], []>} : vector<8x32xbf16>, vector<32x128xbf16>, vector<8x128xf32> -> vector<8x128xf32>
    %c0_3 = arith.constant 0 : index
    %c0_4 = arith.constant 0 : index
    %4 = vector.load %arg2[%c0_3, %c0_4] : memref<1x128xf32, #tpu.memory_space<vmem>>, vector<1x128xf32>
    %5 = vector.broadcast %4 : vector<1x128xf32> to vector<8x128xf32>
    %6 = arith.addf %3, %5 : vector<8x128xf32>
    %cst_5 = arith.constant 0.000000e+00 : f32
    %7 = vector.broadcast %cst_5 : f32 to vector<8x128xf32>
    %8 = arith.maximumf %6, %7 : vector<8x128xf32>
    %9 = arith.truncf %8 : vector<8x128xf32> to vector<8x128xbf16>
    %c0_6 = arith.constant 0 : index
    %c0_7 = arith.constant 0 : index
    %10 = vector.load %arg3[%c0_6, %c0_7] : memref<128x8xbf16, #tpu.memory_space<vmem>>, vector<128x8xbf16>
    %cst_8 = arith.constant dense<0.000000e+00> : vector<8x8xf32>
    %11 = tpu.matmul %9, %10, %cst_8 {dimension_numbers = #tpu.dot_dimension_numbers<[1], [0], [0], [1], [0, 0, 1, 1], [], []>} : vector<8x128xbf16>, vector<128x8xbf16>, vector<8x8xf32> -> vector<8x8xf32>
    %c0_9 = arith.constant 0 : index
    %c0_10 = arith.constant 0 : index
    %12 = vector.load %arg4[%c0_9, %c0_10] : memref<1x8xf32, #tpu.memory_space<vmem>>, vector<1x8xf32>
    %13 = vector.broadcast %12 : vector<1x8xf32> to vector<8x8xf32>
    %14 = arith.addf %11, %13 : vector<8x8xf32>
    %c0_11 = arith.constant 0 : index
    %c0_12 = arith.constant 0 : index
    %15 = vector.load %arg5[%c0_11, %c0_12] : memref<8x8xf32, #tpu.memory_space<vmem>>, vector<8x8xf32>
    tpu.vector_store %arg5[%c0_11, %c0_12], %14 {strides = array<i32>} : memref<8x8xf32, #tpu.memory_space<vmem>>, vector<8x8xf32>,
    return
  }
}

</mosaic_0001>

<llo_original>
// kernel: net_forward.1
$region0: #{net_forward.1}
  #allocation0 [shape = 'u32[]', space=smem, size = 0x4, offset = 0x4, fixed_abs, tag = 'smem constant byte address 0x4 - core index']
  #allocation1 [shape = 'u32[144,128]{1,0:T(1,128)}', space=vmem, size = 0x12000, scoped, tag = 'internal scratch']
  %s0 = inlined_call_operand.vmem [shape: f32[8,32], index: 0, kind: input, shape index: {}]
  %s1 = inlined_call_operand.vmem [shape: bf16[32,128], index: 1, kind: input, shape index: {}]
  %s2 = inlined_call_operand.vmem [shape: f32[1,128], index: 2, kind: input, shape index: {}]
  %s3 = inlined_call_operand.vmem [shape: bf16[128,8], index: 3, kind: input, shape index: {}]
  %s4 = inlined_call_operand.vmem [shape: f32[1,8], index: 4, kind: input, shape index: {}]
  %s5 = inlined_call_operand.hbm [shape: f32[8,8], index: 5, kind: output, shape index: {}]
  %s6 = sld [smem:[#allocation0]]
  $region30: #{net_forward.1} parent=0
    _
  %s8 = ssub.s32 1, %s6
  %s9 = scalar_select 0, %s8, %s6
  $region1: #{net_forward.1} parent=0
    #allocation2 [shape = 'u8[4096]{0}', space=vmem, size = 0x1000, scoped, tag = 'output window, operand 0, single buffered']
    #allocation3 [shape = 's32[1]{0}', space=sflag, size = 0x4, scoped, tag = 'scoped memory for net_forward.1']
    %10 = vsyncpa [#allocation3], 0
    // Predicated region
    $region2: #{net_forward.1} parent=1 // pred_check
      _
    $region3: #{net_forward.1} parent=1 // pred_check_branch
      %12 = sbr.rel (0) target = $region5
    $region4: #{net_forward.1} parent=1 // pred_region
      _
    $region5: #{net_forward.1} parent=1 // pred_fallthru
      _
    // Predicated region
    $region6: #{net_forward.1} parent=1 // pred_check
      _
    $region7: #{net_forward.1} parent=1 // pred_check_branch
      %14 = sbr.rel (0) target = $region9
    $region8: #{net_forward.1} parent=1 // pred_region
      _
    $region9: #{net_forward.1} parent=1 // pred_fallthru
      _
    // Predicated region
    $region10: #{net_forward.1} parent=1 // pred_check
      _
    $region11: #{net_forward.1} parent=1 // pred_check_branch
      %16 = sbr.rel (0) target = $region13
    $region12: #{net_forward.1} parent=1 // pred_region
      _
    $region13: #{net_forward.1} parent=1 // pred_fallthru
      _
    // Predicated region
    $region14: #{net_forward.1} parent=1 // pred_check
      _
    $region15: #{net_forward.1} parent=1 // pred_check_branch
      %18 = sbr.rel (0) target = $region17
    $region16: #{net_forward.1} parent=1 // pred_region
      _
    $region17: #{net_forward.1} parent=1 // pred_fallthru
      _
    // Predicated region
    $region18: #{net_forward.1} parent=1 // pred_check
      _
    $region19: #{net_forward.1} parent=1 // pred_check_branch
      %20 = sbr.rel (0) target = $region21
    $region20: #{net_forward.1} parent=1 // pred_region
      _
    $region21: #{net_forward.1} parent=1 // pred_fallthru
      _
    %v22 = vld [vmem:[%s0] sm:$0xff]
    %v23 = vpack.c.bf16 %v22, %v22
    %v24 = vld [vmem:[%s1] sm:$0xf]
    %v25 = vld [vmem:[%s1 + $0x4] sm:$0xf]
    %v26 = vld [vmem:[%s1 + $0x8] sm:$0xf]
    %v27 = vld [vmem:[%s1 + $0xc] sm:$0xf]
    %v28 = vld [vmem:[%s2] sm:$0x1]
    %v30 = vlaneseq
    %v31 = vshrl.u32 %v30, 7
    %v32 = vsub.s32 0, %v31
    %v33 = vrot.slane %v28, %v32
    %v39 = vunpack.c.l.b16 %v24
    %v40 = vunpack.c.l.b16 %v25
    %v41 = vunpack.c.l.b16 %v26
    %v42 = vunpack.c.l.b16 %v27
    %v43 = vpack.c.b16 %v40, %v39
    %v44 = vpack.c.b16 %v42, %v41
    %vm47 = vcmask 261120
    %v49 = vsel %vm47, %v23, 0
    %51 = vmatprep.subr.bf16.mxu0 0
    %52 = vmatpush1.bf16.msra.mxu0 %v43
    %53 = vmatprep.subr.bf16.mxu0 0
    %54 = vmatpush1.bf16.msra.mxu0 %v44
    %55 = vmatprep.subr.bf16.mxu0 0
    %56 = vmatpush1.bf16.msra.mxu0 0
    %57 = vmatprep.subr.bf16.mxu0 0
    %58 = vmatpush1.bf16.msra.mxu0 0
    %59 = vmatprep.subr.bf16.mxu0 0
    %60 = vmatpush1.bf16.msra.mxu0 0
    %61 = vmatprep.subr.bf16.mxu0 0
    %62 = vmatpush1.bf16.msra.mxu0 0
    %63 = vmatprep.subr.bf16.mxu0 0
    %64 = vmatpush1.bf16.msra.mxu0 0
    %65 = vmatprep.subr.bf16.mxu0 0
    %66 = vmatpush1.bf16.msra.mxu0 0
    %67 = vmatprep.subr.bf16.mxu0 0
    %68 = vmatpush1.bf16.msra.mxu0 0
    %69 = vmatprep.subr.bf16.mxu0 0
    %70 = vmatpush1.bf16.msra.mxu0 0
    %71 = vmatprep.subr.bf16.mxu0 0
    %72 = vmatpush1.bf16.msra.mxu0 0
    %73 = vmatprep.subr.bf16.mxu0 0
    %74 = vmatpush1.bf16.msra.mxu0 0
    %75 = vmatprep.subr.bf16.mxu0 0
    %76 = vmatpush1.bf16.msra.mxu0 0
    %77 = vmatprep.subr.bf16.mxu0 0
    %78 = vmatpush1.bf16.msra.mxu0 0
    %79 = vmatprep.subr.bf16.mxu0 0
    %80 = vmatpush1.bf16.msra.mxu0 0
    %81 = vmatprep.subr.bf16.mxu0 0
    %82 = vmatpush1.bf16.msra.mxu0 0
    %83 = vmatprep.mubr.bf16.mxu0 0
    %84 = vmatmul.mubr.bf16.gmra.mrb[0].mxu0 %v49
    %v85 = vpop.f32.mrb[0].mxu0
    %v86 = vadd.f32 %v33, %v85
    %v87 = vpop.f32.mrb[0].mxu0
    %v88 = vpop.f32.mrb[0].mxu0
    %v89 = vpop.f32.mrb[0].mxu0
    %90 = vdwg.mxu0
    %v91 = vmax.f32 %v86, 0.0
    %v92 = vpack.c.bf16 %v91, %v91
    %v93 = vld [vmem:[%s3] sm:$0xf]
    %v94 = vld [vmem:[%s3 + $0x4] sm:$0xf]
    %v95 = vld [vmem:[%s3 + $0x8] sm:$0xf]
    %v96 = vld [vmem:[%s3 + $0xc] sm:$0xf]
    %v97 = vld [vmem:[%s3 + $0x10] sm:$0xf]
    %v98 = vld [vmem:[%s3 + $0x14] sm:$0xf]
    %v99 = vld [vmem:[%s3 + $0x18] sm:$0xf]
    %v100 = vld [vmem:[%s3 + $0x1c] sm:$0xf]
    %v101 = vld [vmem:[%s3 + $0x20] sm:$0xf]
    %v102 = vld [vmem:[%s3 + $0x24] sm:$0xf]
    %v103 = vld [vmem:[%s3 + $0x28] sm:$0xf]
    %v104 = vld [vmem:[%s3 + $0x2c] sm:$0xf]
    %v105 = vld [vmem:[%s3 + $0x30] sm:$0xf]
    %v106 = vld [vmem:[%s3 + $0x34] sm:$0xf]
    %v107 = vld [vmem:[%s3 + $0x38] sm:$0xf]
    %v108 = vld [vmem:[%s3 + $0x3c] sm:$0xf]
    %v109 = vld [vmem:[%s4] sm:$0x1]
    %v111 = vlaneseq
    %v112 = vshrl.u32 %v111, 7
    %v113 = vsub.s32 0, %v112
    %v114 = vrot.slane %v109, %v113
    %v132 = vunpack.c.l.b16 %v93
    %v133 = vunpack.c.l.b16 %v94
    %v134 = vunpack.c.l.b16 %v95
    %v135 = vunpack.c.l.b16 %v96
    %v136 = vunpack.c.l.b16 %v97
    %v137 = vunpack.c.l.b16 %v98
    %v138 = vunpack.c.l.b16 %v99
    %v139 = vunpack.c.l.b16 %v100
    %v140 = vunpack.c.l.b16 %v101
    %v141 = vunpack.c.l.b16 %v102
    %v142 = vunpack.c.l.b16 %v103
    %v143 = vunpack.c.l.b16 %v104
    %v144 = vunpack.c.l.b16 %v105
    %v145 = vunpack.c.l.b16 %v106
    %v146 = vunpack.c.l.b16 %v107
    %v147 = vunpack.c.l.b16 %v108
    %v148 = vpack.c.b16 %v133, %v132
    %v149 = vpack.c.b16 %v135, %v134
    %v150 = vpack.c.b16 %v137, %v136
    %v151 = vpack.c.b16 %v139, %v138
    %v152 = vpack.c.b16 %v141, %v140
    %v153 = vpack.c.b16 %v143, %v142
    %v154 = vpack.c.b16 %v145, %v144
    %v155 = vpack.c.b16 %v147, %v146
    %164 = vmatprep.subr.bf16.mxu0 0
    %165 = vmatpush1.bf16.msra.mxu0 %v148
    %166 = vmatprep.subr.bf16.mxu0 0
    %167 = vmatpush1.bf16.msra.mxu0 %v149
    %168 = vmatprep.subr.bf16.mxu0 0
    %169 = vmatpush1.bf16.msra.mxu0 %v150
    %170 = vmatprep.subr.bf16.mxu0 0
    %171 = vmatpush1.bf16.msra.mxu0 %v151
    %172 = vmatprep.subr.bf16.mxu0 0
    %173 = vmatpush1.bf16.msra.mxu0 %v152
    %174 = vmatprep.subr.bf16.mxu0 0
    %175 = vmatpush1.bf16.msra.mxu0 %v153
    %176 = vmatprep.subr.bf16.mxu0 0
    %177 = vmatpush1.bf16.msra.mxu0 %v154
    %178 = vmatprep.subr.bf16.mxu0 0
    %179 = vmatpush1.bf16.msra.mxu0 %v155
    %180 = vmatprep.subr.bf16.mxu0 0
    %181 = vmatpush1.bf16.msra.mxu0 0
    %182 = vmatprep.subr.bf16.mxu0 0
    %183 = vmatpush1.bf16.msra.mxu0 0
    %184 = vmatprep.subr.bf16.mxu0 0
    %185 = vmatpush1.bf16.msra.mxu0 0
    %186 = vmatprep.subr.bf16.mxu0 0
    %187 = vmatpush1.bf16.msra.mxu0 0
    %188 = vmatprep.subr.bf16.mxu0 0
    %189 = vmatpush1.bf16.msra.mxu0 0
    %190 = vmatprep.subr.bf16.mxu0 0
    %191 = vmatpush1.bf16.msra.mxu0 0
    %192 = vmatprep.subr.bf16.mxu0 0
    %193 = vmatpush1.bf16.msra.mxu0 0
    %194 = vmatprep.subr.bf16.mxu0 0
    %195 = vmatpush1.bf16.msra.mxu0 0
    %196 = vmatprep.mubr.bf16.mxu0 0
    %197 = vmatmul.mubr.bf16.gmra.mrb[0].mxu0 %v92
    %v198 = vpop.f32.mrb[0].mxu0
    %v199 = vadd.f32 %v114, %v198
    %v200 = vpop.f32.mrb[0].mxu0
    %v201 = vpop.f32.mrb[0].mxu0
    %v202 = vpop.f32.mrb[0].mxu0
    %203 = vdwg.mxu0
    %vm204 = vcmask 64512
    %205 = vst.msk [vmem:[#allocation2] sm:$0xff] %vm204, %v199
    // Predicated region
    $region22: #{net_forward.1} parent=1 // pred_check
      _
    $region23: #{net_forward.1} parent=1 // pred_check_branch
      %207 = sbr.rel (0) target = $region25
    $region24: #{net_forward.1} parent=1 // pred_region
      %s209 = ssub.s32 128, 128
      %210 = vsyncadd [#allocation3], %s209
      %s212 = sshll.u32 [#allocation2], 4
      %s213 = int_to_ptr.vmem [resolvable:$true] %s212
      %215 = dma.vmem_to_hbm [thread:$0]  %s213, 128, %s5, [#allocation3]
    $region25: #{net_forward.1} parent=1 // pred_fallthru
      _
    // Predicated region
    $region26: #{net_forward.1} parent=1 // pred_check
      _
    $region27: #{net_forward.1} parent=1 // pred_check_branch
      %217 = sbr.rel (0) target = $region29
    $region28: #{net_forward.1} parent=1 // pred_region
      %218 = dma.done [#allocation3], 128
    $region29: #{net_forward.1} parent=1 // pred_fallthru
      _
    %219 = vsyncpa [#allocation3], 1

</llo_original>
